<compile_context>
chip_gen: v7x
topology: tpu7x:2x2x1
jax: 0.10.0
libtpu: 0.0.40
codegen_flags: <defaults>
</compile_context>

<pallas_src>
import functools
import math

import jax
import jax.numpy as jnp
from jax import lax
from jax.experimental import pallas as pl
from jax.experimental.pallas import tpu as pltpu

_LEAKY_SLOPE = 0.01  # torch.nn.LeakyReLU default negative_slope


def _leaky_relu(v):
    return jnp.where(v > 0, v, _LEAKY_SLOPE * v)


def _resblock_sepconv_kernel(x_ref, wdw1_ref, wpw1_ref, wdw2_ref, wpw2_ref,
                             o_ref, zpad_ref, *, H, W, f, dilate, pad_dw, pmax):
    """Fused ResBlockSepConv forward for one batch element.

    x_ref    : (1, in_ch, HWp)  zero-haloed flat input, HWp = H*W + 2*pmax
    wdw1_ref : (in_ch, f*f)     depthwise-1 taps (per-channel scalars)
    wpw1_ref : (f_ch, in_ch)    1x1 conv 1
    wdw2_ref : (f_ch, f*f)      depthwise-2 taps
    wpw2_ref : (in_ch, f_ch)    1x1 conv 2
    o_ref    : (1, in_ch, H*W)  lane-dense output
    zpad_ref : (f_ch, HWp)      VMEM scratch: flat-haloed intermediate
    """
    HW = H * W
    in_ch = wdw1_ref.shape[0]
    f_ch = wdw2_ref.shape[0]

    # Column (w) coordinate of every lane of the flattened image; used to mask
    # taps that would wrap across an image row.  Hoisted once (f masks, not
    # f*f) and shared by both depthwise stages.
    ww = lax.broadcasted_iota(jnp.int32, (1, HW), 1) % W
    col_mask = []
    for kw in range(f):
        dw = kw * dilate - pad_dw
        if dw == 0:
            col_mask.append(None)
        else:
            col_mask.append(jnp.logical_and(ww + dw >= 0, ww + dw < W))

    def depthwise(read_window, w_ref, channels):
        """'same' depthwise f x f conv with dilation; f*f shifted VPU FMAs."""
        acc = jnp.zeros((channels, HW), jnp.float32)
        for kh in range(f):
            for kw in range(f):
                dh = kh * dilate - pad_dw
                dw = kw * dilate - pad_dw
                start = pmax + dh * W + dw           # static, in [0, 2*pmax]
                window = read_window(start)          # (channels, HW) from ref
                if col_mask[kw] is not None:
                    window = jnp.where(col_mask[kw], window, 0.0)
                tap = kh * f + kw
                wcol = w_ref[:, tap:tap + 1]         # (channels, 1) per-channel weight
                acc = acc + window * wcol
        return acc

    # ---- SepConv 1: depthwise(in_ch) -> 1x1 (in_ch -> f_ch) -> LeakyReLU ----
    y1 = depthwise(lambda s: x_ref[0, :, s:s + HW], wdw1_ref, in_ch)
    z1 = jnp.dot(wpw1_ref[...], y1, preferred_element_type=jnp.float32)
    z1 = _leaky_relu(z1)

    # Stage the activation flat-haloed in VMEM so depthwise-2 reads its tap
    # windows straight from a ref (keeps vreg pressure to one tap window).
    zpad_ref[...] = jnp.zeros_like(zpad_ref)
    zpad_ref[:, pmax:pmax + HW] = z1

    # ---- SepConv 2: depthwise(f_ch) -> 1x1 (f_ch -> in_ch) ----
    y2 = depthwise(lambda s: zpad_ref[:, s:s + HW], wdw2_ref, f_ch)
    z2 = jnp.dot(wpw2_ref[...], y2, preferred_element_type=jnp.float32)

    # ---- residual add + LeakyReLU (lane-dense (in_ch, H*W) store) ----
    x_center = x_ref[0, :, pmax:pmax + HW]
    o_ref[0] = _leaky_relu(x_center.astype(jnp.float32) + z2).astype(o_ref.dtype)


def resblock_sepconv_forward(x_nchw, w_dw1, w_pw1, w_dw2, w_pw2, *, f_sz, dilate=1):
    """Pallas forward of ResBlockSepConv.  Weights use PyTorch layouts:
    w_dw1: (in_ch, 1, f, f), w_pw1: (f_ch, in_ch, 1, 1),
    w_dw2: (f_ch, 1, f, f),  w_pw2: (in_ch, f_ch, 1, 1).
    """
    n, in_ch, H, W = x_nchw.shape
    f_ch = w_pw1.shape[0]
    assert w_dw1.shape == (in_ch, 1, f_sz, f_sz)
    assert w_pw1.shape == (f_ch, in_ch, 1, 1)
    assert w_dw2.shape == (f_ch, 1, f_sz, f_sz)
    assert w_pw2.shape == (in_ch, f_ch, 1, 1)

    pad_dw = f_sz // 2 + dilate - 1       # depthwise padding (module formula)
    pad_pw = dilate - 1                   # 1x1 conv padding (module formula)
    # The module's residual `x + SepConv2(...)` only type-checks when spatial
    # size is preserved, i.e. odd f_sz and dilate == 1 (so pad_pw == 0).
    # TODO(synk): dilate > 1 grows the spatial size via the padded 1x1 conv and
    # breaks the module's own residual add; not implemented.
    if pad_pw != 0 or 2 * pad_dw != dilate * (f_sz - 1):
        raise NotImplementedError(
            "ResBlockSepConv residual requires odd f_sz and dilate == 1")

    HW = H * W
    pmax = pad_dw * (W + 1)               # flat halo covering every tap shift
    HWp = HW + 2 * pmax

    # Glue (reshape + zero pad only, no transposes): NCHW flattens to
    # (N, C, H*W) for free; a zero halo is added along the flattened axis.
    x_flat = x_nchw.reshape(n, in_ch, HW)
    x_halo = jnp.pad(x_flat, ((0, 0), (0, 0), (pmax, pmax)))

    wd1 = w_dw1.reshape(in_ch, f_sz * f_sz)
    wp1 = w_pw1.reshape(f_ch, in_ch)
    wd2 = w_dw2.reshape(f_ch, f_sz * f_sz)
    wp2 = w_pw2.reshape(in_ch, f_ch)

    kernel = functools.partial(_resblock_sepconv_kernel, H=H, W=W, f=f_sz,
                               dilate=dilate, pad_dw=pad_dw, pmax=pmax)

    itemsize = jnp.dtype(x_nchw.dtype).itemsize
    flops = 2 * n * HW * (f_sz * f_sz * in_ch + in_ch * f_ch
                          + f_sz * f_sz * f_ch + f_ch * in_ch)
    bytes_accessed = itemsize * (x_halo.size + wd1.size + wp1.size
                                 + wd2.size + wp2.size + n * in_ch * HW)

    out_flat = pl.pallas_call(
        kernel,
        out_shape=jax.ShapeDtypeStruct((n, in_ch, HW), x_nchw.dtype),
        grid=(n,),
        in_specs=[
            pl.BlockSpec((1, in_ch, HWp), lambda b: (b, 0, 0)),
            pl.BlockSpec((in_ch, f_sz * f_sz), lambda b: (0, 0)),
            pl.BlockSpec((f_ch, in_ch), lambda b: (0, 0)),
            pl.BlockSpec((f_ch, f_sz * f_sz), lambda b: (0, 0)),
            pl.BlockSpec((in_ch, f_ch), lambda b: (0, 0)),
        ],
        out_specs=pl.BlockSpec((1, in_ch, HW), lambda b: (b, 0, 0)),
        scratch_shapes=[pltpu.VMEM((f_ch, HWp), jnp.float32)],
        compiler_params=pltpu.CompilerParams(
            dimension_semantics=("parallel",)),
        cost_estimate=pl.CostEstimate(flops=flops, transcendentals=0,
                                      bytes_accessed=bytes_accessed),
    )(x_halo, wd1, wp1, wd2, wp2)

    return out_flat.reshape(n, in_ch, H, W)


def kaiming_uniform_fan_out_relu(key, shape, dtype=jnp.float32):
    """torch.nn.init.kaiming_uniform_(mode='fan_out', nonlinearity='relu')
    for a conv weight of shape (out_ch, in_ch/groups, kh, kw)."""
    receptive = 1
    for s in shape[2:]:
        receptive *= s
    fan_out = shape[0] * receptive
    bound = math.sqrt(2.0) * math.sqrt(3.0 / fan_out)
    return jax.random.uniform(key, shape, dtype=dtype, minval=-bound, maxval=bound)


if __name__ == "__main__":
    key = jax.random.PRNGKey(0)
    k_x, k1, k2, k3, k4 = jax.random.split(key, 5)

    in_ch, f_ch, f_sz, dilate = 4, 8, 3, 1
    N, H, W = 2, 16, 16

    x = jax.random.normal(k_x, (N, in_ch, H, W), dtype=jnp.float32)
    w_dw1 = kaiming_uniform_fan_out_relu(k1, (in_ch, 1, f_sz, f_sz))
    w_pw1 = kaiming_uniform_fan_out_relu(k2, (f_ch, in_ch, 1, 1))
    w_dw2 = kaiming_uniform_fan_out_relu(k3, (f_ch, 1, f_sz, f_sz))
    w_pw2 = kaiming_uniform_fan_out_relu(k4, (in_ch, f_ch, 1, 1))

    out = resblock_sepconv_forward(x, w_dw1, w_pw1, w_dw2, w_pw2,
                                   f_sz=f_sz, dilate=dilate)
    out = jax.block_until_ready(out)

    # Cross-check against XLA convolutions reproducing the PyTorch module.
    def ref_forward(x):
        pad_dw = f_sz // 2 + dilate - 1
        pad_pw = dilate - 1
        conv = functools.partial(
            lax.conv_general_dilated, window_strides=(1, 1),
            rhs_dilation=(dilate, dilate),
            dimension_numbers=("NCHW", "OIHW", "NCHW"),
            precision=lax.Precision.HIGHEST)
        lrelu = lambda v: jnp.where(v > 0, v, 0.01 * v)
        y = conv(x, w_dw1, padding=[(pad_dw, pad_dw)] * 2,
                 feature_group_count=in_ch)
        y = conv(y, w_pw1, padding=[(pad_pw, pad_pw)] * 2)
        y = lrelu(y)
        y = conv(y, w_dw2, padding=[(pad_dw, pad_dw)] * 2,
                 feature_group_count=f_ch)
        y = conv(y, w_pw2, padding=[(pad_pw, pad_pw)] * 2)
        return lrelu(x + y)

    ref = jax.block_until_ready(ref_forward(x))

    assert out.shape == ref.shape, (out.shape, ref.shape)
    max_err = float(jnp.max(jnp.abs(out - ref)))
    assert jnp.allclose(out, ref, rtol=1e-3, atol=1e-3), max_err

    print("KERNEL_OK")
</pallas_src>

<mosaic_0001>
module attributes {stable_mosaic.version = 11 : i64} {
  func.func @_resblock_sepconv_kernel(%arg0: i32, %arg1: memref<1x4x290xf32, #tpu.memory_space<vmem>>, %arg2: memref<4x9xf32, #tpu.memory_space<vmem>>, %arg3: memref<8x4xf32, #tpu.memory_space<vmem>>, %arg4: memref<8x9xf32, #tpu.memory_space<vmem>>, %arg5: memref<4x8xf32, #tpu.memory_space<vmem>>, %arg6: memref<1x4x256xf32, #tpu.memory_space<vmem>>, %arg7: memref<8x290xf32, #tpu.memory_space<vmem>>) attributes {dimension_semantics = [#tpu.dimension_semantics<parallel>], iteration_bounds = array<i64: 2>, scalar_prefetch = 0 : i64, scratch_operands = 1 : i64, tpu.core_type = #tpu.core_type<tc>, window_params = [{transform_indices = @transform_0, window_bounds = array<i64: 1, 4, 290>}, {pipeline_mode = #tpu.pipeline_mode<synchronous>, transform_indices = @transform_1, window_bounds = array<i64: 4, 9>}, {pipeline_mode = #tpu.pipeline_mode<synchronous>, transform_indices = @transform_2, window_bounds = array<i64: 8, 4>}, {pipeline_mode = #tpu.pipeline_mode<synchronous>, transform_indices = @transform_3, window_bounds = array<i64: 8, 9>}, {pipeline_mode = #tpu.pipeline_mode<synchronous>, transform_indices = @transform_4, window_bounds = array<i64: 4, 8>}, {transform_indices = @transform_5, window_bounds = array<i64: 1, 4, 256>}]} {
    %0 = tpu.iota {dimensions = array<i32: 1>} : vector<1x256xi32>
    %c16_i32 = arith.constant 16 : i32
    %c0_i32 = arith.constant 0 : i32
    %1 = arith.cmpi eq, %c16_i32, %c0_i32 : i32
    %c1_i32 = arith.constant 1 : i32
    %2 = arith.select %1, %c1_i32, %c16_i32 : i32
    %3 = vector.broadcast %2 : i32 to vector<1x256xi32>
    %4 = arith.remsi %0, %3 : vector<1x256xi32>
    %c0_i32_0 = arith.constant 0 : i32
    %5 = vector.broadcast %c0_i32_0 : i32 to vector<1x256xi32>
    %6 = arith.cmpi ne, %4, %5 : vector<1x256xi32>
    %c0_i32_1 = arith.constant 0 : i32
    %7 = vector.broadcast %c0_i32_1 : i32 to vector<1x256xi32>
    %8 = arith.cmpi slt, %4, %7 : vector<1x256xi32>
    %c0_i32_2 = arith.constant 0 : i32
    %9 = arith.cmpi slt, %2, %c0_i32_2 : i32
    %10 = vector.broadcast %9 : i1 to vector<1x256xi1>
    %11 = vector.broadcast %10 : vector<1x256xi1> to vector<1x256xi1>
    %12 = arith.xori %8, %11 : vector<1x256xi1>
    %13 = arith.andi %12, %6 : vector<1x256xi1>
    %14 = vector.broadcast %2 : i32 to vector<1x256xi32>
    %15 = arith.addi %4, %14 : vector<1x256xi32>
    %16 = arith.select %13, %15, %4 : vector<1x256xi1>, vector<1x256xi32>
    %c-1_i32 = arith.constant -1 : i32
    %17 = vector.broadcast %c-1_i32 : i32 to vector<1x256xi32>
    %18 = arith.addi %16, %17 : vector<1x256xi32>
    %c0_i32_3 = arith.constant 0 : i32
    %19 = vector.broadcast %c0_i32_3 : i32 to vector<1x256xi32>
    %20 = arith.cmpi sge, %18, %19 : vector<1x256xi32>
    %c-1_i32_4 = arith.constant -1 : i32
    %21 = vector.broadcast %c-1_i32_4 : i32 to vector<1x256xi32>
    %22 = arith.addi %16, %21 : vector<1x256xi32>
    %c16_i32_5 = arith.constant 16 : i32
    %23 = vector.broadcast %c16_i32_5 : i32 to vector<1x256xi32>
    %24 = arith.cmpi slt, %22, %23 : vector<1x256xi32>
    %25 = arith.andi %20, %24 : vector<1x256xi1>
    %c1_i32_6 = arith.constant 1 : i32
    %26 = vector.broadcast %c1_i32_6 : i32 to vector<1x256xi32>
    %27 = arith.addi %16, %26 : vector<1x256xi32>
    %c0_i32_7 = arith.constant 0 : i32
    %28 = vector.broadcast %c0_i32_7 : i32 to vector<1x256xi32>
    %29 = arith.cmpi sge, %27, %28 : vector<1x256xi32>
    %c1_i32_8 = arith.constant 1 : i32
    %30 = vector.broadcast %c1_i32_8 : i32 to vector<1x256xi32>
    %31 = arith.addi %16, %30 : vector<1x256xi32>
    %c16_i32_9 = arith.constant 16 : i32
    %32 = vector.broadcast %c16_i32_9 : i32 to vector<1x256xi32>
    %33 = arith.cmpi slt, %31, %32 : vector<1x256xi32>
    %34 = arith.andi %29, %33 : vector<1x256xi1>
    %cst = arith.constant 0.000000e+00 : f32
    %35 = vector.broadcast %cst : f32 to vector<4x256xf32>
    %c0 = arith.constant 0 : index
    %c0_10 = arith.constant 0 : index
    %c0_11 = arith.constant 0 : index
    %36 = vector.load %arg1[%c0, %c0_10, %c0_11] : memref<1x4x290xf32, #tpu.memory_space<vmem>>, vector<1x4x256xf32>
    %37 = vector.shape_cast %36 : vector<1x4x256xf32> to vector<4x256xf32>
    %cst_12 = arith.constant 0.000000e+00 : f32
    %38 = vector.shape_cast %25 : vector<1x256xi1> to vector<1x256xi1>
    %39 = vector.broadcast %38 : vector<1x256xi1> to vector<4x256xi1>
    %40 = vector.broadcast %cst_12 : f32 to vector<4x256xf32>
    %41 = arith.select %39, %37, %40 : vector<4x256xi1>, vector<4x256xf32>
    %c0_13 = arith.constant 0 : index
    %c0_14 = arith.constant 0 : index
    %42 = vector.load %arg2[%c0_13, %c0_14] : memref<4x9xf32, #tpu.memory_space<vmem>>, vector<4x1xf32>
    %43 = vector.broadcast %42 : vector<4x1xf32> to vector<4x256xf32>
    %44 = arith.mulf %41, %43 : vector<4x256xf32>
    %45 = arith.addf %35, %44 : vector<4x256xf32>
    %c0_15 = arith.constant 0 : index
    %c0_16 = arith.constant 0 : index
    %c1 = arith.constant 1 : index
    %46 = vector.load %arg1[%c0_15, %c0_16, %c1] : memref<1x4x290xf32, #tpu.memory_space<vmem>>, vector<1x4x256xf32>
    %47 = vector.shape_cast %46 : vector<1x4x256xf32> to vector<4x256xf32>
    %c0_17 = arith.constant 0 : index
    %c1_18 = arith.constant 1 : index
    %48 = vector.load %arg2[%c0_17, %c1_18] : memref<4x9xf32, #tpu.memory_space<vmem>>, vector<4x1xf32>
    %49 = vector.broadcast %48 : vector<4x1xf32> to vector<4x256xf32>
    %50 = arith.mulf %47, %49 : vector<4x256xf32>
    %51 = arith.addf %45, %50 : vector<4x256xf32>
    %c0_19 = arith.constant 0 : index
    %c0_20 = arith.constant 0 : index
    %c2 = arith.constant 2 : index
    %52 = vector.load %arg1[%c0_19, %c0_20, %c2] : memref<1x4x290xf32, #tpu.memory_space<vmem>>, vector<1x4x256xf32>
    %53 = vector.shape_cast %52 : vector<1x4x256xf32> to vector<4x256xf32>
    %cst_21 = arith.constant 0.000000e+00 : f32
    %54 = vector.shape_cast %34 : vector<1x256xi1> to vector<1x256xi1>
    %55 = vector.broadcast %54 : vector<1x256xi1> to vector<4x256xi1>
    %56 = vector.broadcast %cst_21 : f32 to vector<4x256xf32>
    %57 = arith.select %55, %53, %56 : vector<4x256xi1>, vector<4x256xf32>
    %c0_22 = arith.constant 0 : index
    %c2_23 = arith.constant 2 : index
    %58 = vector.load %arg2[%c0_22, %c2_23] : memref<4x9xf32, #tpu.memory_space<vmem>>, vector<4x1xf32>
    %59 = vector.broadcast %58 : vector<4x1xf32> to vector<4x256xf32>
    %60 = arith.mulf %57, %59 : vector<4x256xf32>
    %61 = arith.addf %51, %60 : vector<4x256xf32>
    %c0_24 = arith.constant 0 : index
    %c0_25 = arith.constant 0 : index
    %c16 = arith.constant 16 : index
    %62 = vector.load %arg1[%c0_24, %c0_25, %c16] : memref<1x4x290xf32, #tpu.memory_space<vmem>>, vector<1x4x256xf32>
    %63 = vector.shape_cast %62 : vector<1x4x256xf32> to vector<4x256xf32>
    %cst_26 = arith.constant 0.000000e+00 : f32
    %64 = vector.shape_cast %25 : vector<1x256xi1> to vector<1x256xi1>
    %65 = vector.broadcast %64 : vector<1x256xi1> to vector<4x256xi1>
    %66 = vector.broadcast %cst_26 : f32 to vector<4x256xf32>
    %67 = arith.select %65, %63, %66 : vector<4x256xi1>, vector<4x256xf32>
    %c0_27 = arith.constant 0 : index
    %c3 = arith.constant 3 : index
    %68 = vector.load %arg2[%c0_27, %c3] : memref<4x9xf32, #tpu.memory_space<vmem>>, vector<4x1xf32>
    %69 = vector.broadcast %68 : vector<4x1xf32> to vector<4x256xf32>
    %70 = arith.mulf %67, %69 : vector<4x256xf32>
    %71 = arith.addf %61, %70 : vector<4x256xf32>
    %c0_28 = arith.constant 0 : index
    %c0_29 = arith.constant 0 : index
    %c17 = arith.constant 17 : index
    %72 = vector.load %arg1[%c0_28, %c0_29, %c17] : memref<1x4x290xf32, #tpu.memory_space<vmem>>, vector<1x4x256xf32>
    %73 = vector.shape_cast %72 : vector<1x4x256xf32> to vector<4x256xf32>
    %c0_30 = arith.constant 0 : index
    %c4 = arith.constant 4 : index
    %74 = vector.load %arg2[%c0_30, %c4] : memref<4x9xf32, #tpu.memory_space<vmem>>, vector<4x1xf32>
    %75 = vector.broadcast %74 : vector<4x1xf32> to vector<4x256xf32>
    %76 = arith.mulf %73, %75 : vector<4x256xf32>
    %77 = arith.addf %71, %76 : vector<4x256xf32>
    %c0_31 = arith.constant 0 : index
    %c0_32 = arith.constant 0 : index
    %c18 = arith.constant 18 : index
    %78 = vector.load %arg1[%c0_31, %c0_32, %c18] : memref<1x4x290xf32, #tpu.memory_space<vmem>>, vector<1x4x256xf32>
    %79 = vector.shape_cast %78 : vector<1x4x256xf32> to vector<4x256xf32>
    %cst_33 = arith.constant 0.000000e+00 : f32
    %80 = vector.shape_cast %34 : vector<1x256xi1> to vector<1x256xi1>
    %81 = vector.broadcast %80 : vector<1x256xi1> to vector<4x256xi1>
    %82 = vector.broadcast %cst_33 : f32 to vector<4x256xf32>
    %83 = arith.select %81, %79, %82 : vector<4x256xi1>, vector<4x256xf32>
    %c0_34 = arith.constant 0 : index
    %c5 = arith.constant 5 : index
    %84 = vector.load %arg2[%c0_34, %c5] : memref<4x9xf32, #tpu.memory_space<vmem>>, vector<4x1xf32>
    %85 = vector.broadcast %84 : vector<4x1xf32> to vector<4x256xf32>
    %86 = arith.mulf %83, %85 : vector<4x256xf32>
    %87 = arith.addf %77, %86 : vector<4x256xf32>
    %c0_35 = arith.constant 0 : index
    %c0_36 = arith.constant 0 : index
    %c32 = arith.constant 32 : index
    %88 = vector.load %arg1[%c0_35, %c0_36, %c32] : memref<1x4x290xf32, #tpu.memory_space<vmem>>, vector<1x4x256xf32>
    %89 = vector.shape_cast %88 : vector<1x4x256xf32> to vector<4x256xf32>
    %cst_37 = arith.constant 0.000000e+00 : f32
    %90 = vector.shape_cast %25 : vector<1x256xi1> to vector<1x256xi1>
    %91 = vector.broadcast %90 : vector<1x256xi1> to vector<4x256xi1>
    %92 = vector.broadcast %cst_37 : f32 to vector<4x256xf32>
    %93 = arith.select %91, %89, %92 : vector<4x256xi1>, vector<4x256xf32>
    %c0_38 = arith.constant 0 : index
    %c6 = arith.constant 6 : index
    %94 = vector.load %arg2[%c0_38, %c6] : memref<4x9xf32, #tpu.memory_space<vmem>>, vector<4x1xf32>
    %95 = vector.broadcast %94 : vector<4x1xf32> to vector<4x256xf32>
    %96 = arith.mulf %93, %95 : vector<4x256xf32>
    %97 = arith.addf %87, %96 : vector<4x256xf32>
    %c0_39 = arith.constant 0 : index
    %c0_40 = arith.constant 0 : index
    %c33 = arith.constant 33 : index
    %98 = vector.load %arg1[%c0_39, %c0_40, %c33] : memref<1x4x290xf32, #tpu.memory_space<vmem>>, vector<1x4x256xf32>
    %99 = vector.shape_cast %98 : vector<1x4x256xf32> to vector<4x256xf32>
    %c0_41 = arith.constant 0 : index
    %c7 = arith.constant 7 : index
    %100 = vector.load %arg2[%c0_41, %c7] : memref<4x9xf32, #tpu.memory_space<vmem>>, vector<4x1xf32>
    %101 = vector.broadcast %100 : vector<4x1xf32> to vector<4x256xf32>
    %102 = arith.mulf %99, %101 : vector<4x256xf32>
    %103 = arith.addf %97, %102 : vector<4x256xf32>
    %c0_42 = arith.constant 0 : index
    %c0_43 = arith.constant 0 : index
    %c34 = arith.constant 34 : index
    %104 = vector.load %arg1[%c0_42, %c0_43, %c34] : memref<1x4x290xf32, #tpu.memory_space<vmem>>, vector<1x4x256xf32>
    %105 = vector.shape_cast %104 : vector<1x4x256xf32> to vector<4x256xf32>
    %cst_44 = arith.constant 0.000000e+00 : f32
    %106 = vector.shape_cast %34 : vector<1x256xi1> to vector<1x256xi1>
    %107 = vector.broadcast %106 : vector<1x256xi1> to vector<4x256xi1>
    %108 = vector.broadcast %cst_44 : f32 to vector<4x256xf32>
    %109 = arith.select %107, %105, %108 : vector<4x256xi1>, vector<4x256xf32>
    %c0_45 = arith.constant 0 : index
    %c8 = arith.constant 8 : index
    %110 = vector.load %arg2[%c0_45, %c8] : memref<4x9xf32, #tpu.memory_space<vmem>>, vector<4x1xf32>
    %111 = vector.broadcast %110 : vector<4x1xf32> to vector<4x256xf32>
    %112 = arith.mulf %109, %111 : vector<4x256xf32>
    %113 = arith.addf %103, %112 : vector<4x256xf32>
    %c0_46 = arith.constant 0 : index
    %c0_47 = arith.constant 0 : index
    %114 = vector.load %arg3[%c0_46, %c0_47] : memref<8x4xf32, #tpu.memory_space<vmem>>, vector<8x4xf32>
    %cst_48 = arith.constant dense<0.000000e+00> : vector<8x256xf32>
    %115 = tpu.matmul %114, %113, %cst_48 {dimension_numbers = #tpu.dot_dimension_numbers<[1], [0], [0], [1], [0, 0, 1, 1], [], []>} : vector<8x4xf32>, vector<4x256xf32>, vector<8x256xf32> -> vector<8x256xf32>
    %cst_49 = arith.constant 0.000000e+00 : f32
    %116 = vector.broadcast %cst_49 : f32 to vector<8x256xf32>
    %117 = arith.cmpf ogt, %115, %116 : vector<8x256xf32>
    %cst_50 = arith.constant 0.00999999977 : f32
    %118 = vector.broadcast %cst_50 : f32 to vector<8x256xf32>
    %119 = arith.mulf %118, %115 : vector<8x256xf32>
    %120 = arith.select %117, %115, %119 : vector<8x256xi1>, vector<8x256xf32>
    %cst_51 = arith.constant 0.000000e+00 : f32
    %121 = vector.broadcast %cst_51 : f32 to vector<8x290xf32>
    %c0_52 = arith.constant 0 : index
    %c0_53 = arith.constant 0 : index
    %122 = vector.load %arg7[%c0_52, %c0_53] : memref<8x290xf32, #tpu.memory_space<vmem>>, vector<8x290xf32>
    tpu.vector_store %arg7[%c0_52, %c0_53], %121 {strides = array<i32>} : memref<8x290xf32, #tpu.memory_space<vmem>>, vector<8x290xf32>,
    %c0_54 = arith.constant 0 : index
    %c17_55 = arith.constant 17 : index
    %123 = vector.load %arg7[%c0_54, %c17_55] : memref<8x290xf32, #tpu.memory_space<vmem>>, vector<8x256xf32>
    tpu.vector_store %arg7[%c0_54, %c17_55], %120 {strides = array<i32>} : memref<8x290xf32, #tpu.memory_space<vmem>>, vector<8x256xf32>,
    %cst_56 = arith.constant 0.000000e+00 : f32
    %124 = vector.broadcast %cst_56 : f32 to vector<8x256xf32>
    %c0_57 = arith.constant 0 : index
    %c0_58 = arith.constant 0 : index
    %125 = vector.load %arg7[%c0_57, %c0_58] : memref<8x290xf32, #tpu.memory_space<vmem>>, vector<8x256xf32>
    %cst_59 = arith.constant 0.000000e+00 : f32
    %126 = vector.shape_cast %25 : vector<1x256xi1> to vector<1x256xi1>
    %127 = vector.broadcast %126 : vector<1x256xi1> to vector<8x256xi1>
    %128 = vector.broadcast %cst_59 : f32 to vector<8x256xf32>
    %129 = arith.select %127, %125, %128 : vector<8x256xi1>, vector<8x256xf32>
    %c0_60 = arith.constant 0 : index
    %c0_61 = arith.constant 0 : index
    %130 = vector.load %arg4[%c0_60, %c0_61] : memref<8x9xf32, #tpu.memory_space<vmem>>, vector<8x1xf32>
    %131 = vector.broadcast %130 : vector<8x1xf32> to vector<8x256xf32>
    %132 = arith.mulf %129, %131 : vector<8x256xf32>
    %133 = arith.addf %124, %132 : vector<8x256xf32>
    %c0_62 = arith.constant 0 : index
    %c1_63 = arith.constant 1 : index
    %134 = vector.load %arg7[%c0_62, %c1_63] : memref<8x290xf32, #tpu.memory_space<vmem>>, vector<8x256xf32>
    %c0_64 = arith.constant 0 : index
    %c1_65 = arith.constant 1 : index
    %135 = vector.load %arg4[%c0_64, %c1_65] : memref<8x9xf32, #tpu.memory_space<vmem>>, vector<8x1xf32>
    %136 = vector.broadcast %135 : vector<8x1xf32> to vector<8x256xf32>
    %137 = arith.mulf %134, %136 : vector<8x256xf32>
    %138 = arith.addf %133, %137 : vector<8x256xf32>
    %c0_66 = arith.constant 0 : index
    %c2_67 = arith.constant 2 : index
    %139 = vector.load %arg7[%c0_66, %c2_67] : memref<8x290xf32, #tpu.memory_space<vmem>>, vector<8x256xf32>
    %cst_68 = arith.constant 0.000000e+00 : f32
    %140 = vector.shape_cast %34 : vector<1x256xi1> to vector<1x256xi1>
    %141 = vector.broadcast %140 : vector<1x256xi1> to vector<8x256xi1>
    %142 = vector.broadcast %cst_68 : f32 to vector<8x256xf32>
    %143 = arith.select %141, %139, %142 : vector<8x256xi1>, vector<8x256xf32>
    %c0_69 = arith.constant 0 : index
    %c2_70 = arith.constant 2 : index
    %144 = vector.load %arg4[%c0_69, %c2_70] : memref<8x9xf32, #tpu.memory_space<vmem>>, vector<8x1xf32>
    %145 = vector.broadcast %144 : vector<8x1xf32> to vector<8x256xf32>
    %146 = arith.mulf %143, %145 : vector<8x256xf32>
    %147 = arith.addf %138, %146 : vector<8x256xf32>
    %c0_71 = arith.constant 0 : index
    %c16_72 = arith.constant 16 : index
    %148 = vector.load %arg7[%c0_71, %c16_72] : memref<8x290xf32, #tpu.memory_space<vmem>>, vector<8x256xf32>
    %cst_73 = arith.constant 0.000000e+00 : f32
    %149 = vector.shape_cast %25 : vector<1x256xi1> to vector<1x256xi1>
    %150 = vector.broadcast %149 : vector<1x256xi1> to vector<8x256xi1>
    %151 = vector.broadcast %cst_73 : f32 to vector<8x256xf32>
    %152 = arith.select %150, %148, %151 : vector<8x256xi1>, vector<8x256xf32>
    %c0_74 = arith.constant 0 : index
    %c3_75 = arith.constant 3 : index
    %153 = vector.load %arg4[%c0_74, %c3_75] : memref<8x9xf32, #tpu.memory_space<vmem>>, vector<8x1xf32>
    %154 = vector.broadcast %153 : vector<8x1xf32> to vector<8x256xf32>
    %155 = arith.mulf %152, %154 : vector<8x256xf32>
    %156 = arith.addf %147, %155 : vector<8x256xf32>
    %c0_76 = arith.constant 0 : index
    %c17_77 = arith.constant 17 : index
    %157 = vector.load %arg7[%c0_76, %c17_77] : memref<8x290xf32, #tpu.memory_space<vmem>>, vector<8x256xf32>
    %c0_78 = arith.constant 0 : index
    %c4_79 = arith.constant 4 : index
    %158 = vector.load %arg4[%c0_78, %c4_79] : memref<8x9xf32, #tpu.memory_space<vmem>>, vector<8x1xf32>
    %159 = vector.broadcast %158 : vector<8x1xf32> to vector<8x256xf32>
    %160 = arith.mulf %157, %159 : vector<8x256xf32>
    %161 = arith.addf %156, %160 : vector<8x256xf32>
    %c0_80 = arith.constant 0 : index
    %c18_81 = arith.constant 18 : index
    %162 = vector.load %arg7[%c0_80, %c18_81] : memref<8x290xf32, #tpu.memory_space<vmem>>, vector<8x256xf32>
    %cst_82 = arith.constant 0.000000e+00 : f32
    %163 = vector.shape_cast %34 : vector<1x256xi1> to vector<1x256xi1>
    %164 = vector.broadcast %163 : vector<1x256xi1> to vector<8x256xi1>
    %165 = vector.broadcast %cst_82 : f32 to vector<8x256xf32>
    %166 = arith.select %164, %162, %165 : vector<8x256xi1>, vector<8x256xf32>
    %c0_83 = arith.constant 0 : index
    %c5_84 = arith.constant 5 : index
    %167 = vector.load %arg4[%c0_83, %c5_84] : memref<8x9xf32, #tpu.memory_space<vmem>>, vector<8x1xf32>
    %168 = vector.broadcast %167 : vector<8x1xf32> to vector<8x256xf32>
    %169 = arith.mulf %166, %168 : vector<8x256xf32>
    %170 = arith.addf %161, %169 : vector<8x256xf32>
    %c0_85 = arith.constant 0 : index
    %c32_86 = arith.constant 32 : index
    %171 = vector.load %arg7[%c0_85, %c32_86] : memref<8x290xf32, #tpu.memory_space<vmem>>, vector<8x256xf32>
    %cst_87 = arith.constant 0.000000e+00 : f32
    %172 = vector.shape_cast %25 : vector<1x256xi1> to vector<1x256xi1>
    %173 = vector.broadcast %172 : vector<1x256xi1> to vector<8x256xi1>
    %174 = vector.broadcast %cst_87 : f32 to vector<8x256xf32>
    %175 = arith.select %173, %171, %174 : vector<8x256xi1>, vector<8x256xf32>
    %c0_88 = arith.constant 0 : index
    %c6_89 = arith.constant 6 : index
    %176 = vector.load %arg4[%c0_88, %c6_89] : memref<8x9xf32, #tpu.memory_space<vmem>>, vector<8x1xf32>
    %177 = vector.broadcast %176 : vector<8x1xf32> to vector<8x256xf32>
    %178 = arith.mulf %175, %177 : vector<8x256xf32>
    %179 = arith.addf %170, %178 : vector<8x256xf32>
    %c0_90 = arith.constant 0 : index
    %c33_91 = arith.constant 33 : index
    %180 = vector.load %arg7[%c0_90, %c33_91] : memref<8x290xf32, #tpu.memory_space<vmem>>, vector<8x256xf32>
    %c0_92 = arith.constant 0 : index
    %c7_93 = arith.constant 7 : index
    %181 = vector.load %arg4[%c0_92, %c7_93] : memref<8x9xf32, #tpu.memory_space<vmem>>, vector<8x1xf32>
    %182 = vector.broadcast %181 : vector<8x1xf32> to vector<8x256xf32>
    %183 = arith.mulf %180, %182 : vector<8x256xf32>
    %184 = arith.addf %179, %183 : vector<8x256xf32>
    %c0_94 = arith.constant 0 : index
    %c34_95 = arith.constant 34 : index
    %185 = vector.load %arg7[%c0_94, %c34_95] : memref<8x290xf32, #tpu.memory_space<vmem>>, vector<8x256xf32>
    %cst_96 = arith.constant 0.000000e+00 : f32
    %186 = vector.shape_cast %34 : vector<1x256xi1> to vector<1x256xi1>
    %187 = vector.broadcast %186 : vector<1x256xi1> to vector<8x256xi1>
    %188 = vector.broadcast %cst_96 : f32 to vector<8x256xf32>
    %189 = arith.select %187, %185, %188 : vector<8x256xi1>, vector<8x256xf32>
    %c0_97 = arith.constant 0 : index
    %c8_98 = arith.constant 8 : index
    %190 = vector.load %arg4[%c0_97, %c8_98] : memref<8x9xf32, #tpu.memory_space<vmem>>, vector<8x1xf32>
    %191 = vector.broadcast %190 : vector<8x1xf32> to vector<8x256xf32>
    %192 = arith.mulf %189, %191 : vector<8x256xf32>
    %193 = arith.addf %184, %192 : vector<8x256xf32>
    %c0_99 = arith.constant 0 : index
    %c0_100 = arith.constant 0 : index
    %194 = vector.load %arg5[%c0_99, %c0_100] : memref<4x8xf32, #tpu.memory_space<vmem>>, vector<4x8xf32>
    %cst_101 = arith.constant dense<0.000000e+00> : vector<4x256xf32>
    %195 = tpu.matmul %194, %193, %cst_101 {dimension_numbers = #tpu.dot_dimension_numbers<[1], [0], [0], [1], [0, 0, 1, 1], [], []>} : vector<4x8xf32>, vector<8x256xf32>, vector<4x256xf32> -> vector<4x256xf32>
    %c0_102 = arith.constant 0 : index
    %c0_103 = arith.constant 0 : index
    %c17_104 = arith.constant 17 : index
    %196 = vector.load %arg1[%c0_102, %c0_103, %c17_104] : memref<1x4x290xf32, #tpu.memory_space<vmem>>, vector<1x4x256xf32>
    %197 = vector.shape_cast %196 : vector<1x4x256xf32> to vector<4x256xf32>
    %198 = arith.addf %197, %195 : vector<4x256xf32>
    %cst_105 = arith.constant 0.000000e+00 : f32
    %199 = vector.broadcast %cst_105 : f32 to vector<4x256xf32>
    %200 = arith.cmpf ogt, %198, %199 : vector<4x256xf32>
    %cst_106 = arith.constant 0.00999999977 : f32
    %201 = vector.broadcast %cst_106 : f32 to vector<4x256xf32>
    %202 = arith.mulf %201, %198 : vector<4x256xf32>
    %203 = arith.select %200, %198, %202 : vector<4x256xi1>, vector<4x256xf32>
    %c0_107 = arith.constant 0 : index
    %c0_108 = arith.constant 0 : index
    %c0_109 = arith.constant 0 : index
    %204 = vector.load %arg6[%c0_107, %c0_108, %c0_109] : memref<1x4x256xf32, #tpu.memory_space<vmem>>, vector<1x4x256xf32>
    %205 = vector.shape_cast %204 : vector<1x4x256xf32> to vector<4x256xf32>
    %206 = vector.shape_cast %203 : vector<4x256xf32> to vector<1x4x256xf32>
    tpu.vector_store %arg6[%c0_107, %c0_108, %c0_109], %206 {strides = array<i32>} : memref<1x4x256xf32, #tpu.memory_space<vmem>>, vector<1x4x256xf32>,
    return
  }
  func.func @transform_0(%arg0: i32) -> (i32, i32, i32) {
    %c0_i32 = arith.constant 0 : i32
    %c0_i32_0 = arith.constant 0 : i32
    %c0_i32_1 = arith.constant 0 : i32
    return %arg0, %c0_i32, %c0_i32_0 : i32, i32, i32
  }
  func.func @transform_1(%arg0: i32) -> (i32, i32) {
    %c0_i32 = arith.constant 0 : i32
    %c0_i32_0 = arith.constant 0 : i32
    %c0_i32_1 = arith.constant 0 : i32
    return %c0_i32, %c0_i32_0 : i32, i32
  }
  func.func @transform_2(%arg0: i32) -> (i32, i32) {
    %c0_i32 = arith.constant 0 : i32
    %c0_i32_0 = arith.constant 0 : i32
    %c0_i32_1 = arith.constant 0 : i32
    return %c0_i32, %c0_i32_0 : i32, i32
  }
  func.func @transform_3(%arg0: i32) -> (i32, i32) {
    %c0_i32 = arith.constant 0 : i32
    %c0_i32_0 = arith.constant 0 : i32
    %c0_i32_1 = arith.constant 0 : i32
    return %c0_i32, %c0_i32_0 : i32, i32
  }
  func.func @transform_4(%arg0: i32) -> (i32, i32) {
    %c0_i32 = arith.constant 0 : i32
    %c0_i32_0 = arith.constant 0 : i32
    %c0_i32_1 = arith.constant 0 : i32
    return %c0_i32, %c0_i32_0 : i32, i32
  }
  func.func @transform_5(%arg0: i32) -> (i32, i32, i32) {
    %c0_i32 = arith.constant 0 : i32
    %c0_i32_0 = arith.constant 0 : i32
    %c0_i32_1 = arith.constant 0 : i32
    return %arg0, %c0_i32, %c0_i32_0 : i32, i32, i32
  }
}

</mosaic_0001>

<llo_original>
// kernel: tpu_custom_call.1
$region0: #{tpu_custom_call.1}
  #allocation0 [shape = 'u32[]', space=smem, size = 0x4, offset = 0x4, fixed_abs, tag = 'smem constant byte address 0x4 - core index']
  #allocation1 [shape = 'u32[144,128]{1,0:T(1,128)}', space=vmem, size = 0x12000, scoped, tag = 'internal scratch']
  #allocation2 [shape = 'f32[8,290]{1,0:T(8,128)}', space=vmem, size = 0x3000, scoped, tag = 'scratch operand']
  %s0 = inlined_call_operand.hbm [shape: f32[2,4,290], index: 0, kind: input, shape index: {}]
  %s1 = inlined_call_operand.vmem [shape: f32[4,9], index: 1, kind: input, shape index: {}]
  %s2 = inlined_call_operand.vmem [shape: f32[8,4], index: 2, kind: input, shape index: {}]
  %s3 = inlined_call_operand.vmem [shape: f32[8,9], index: 3, kind: input, shape index: {}]
  %s4 = inlined_call_operand.vmem [shape: f32[4,8], index: 4, kind: input, shape index: {}]
  %s5 = inlined_call_operand.hbm [shape: f32[2,4,256], index: 5, kind: output, shape index: {}]
  %s6 = sld [smem:[#allocation0]]
  $region57: #{tpu_custom_call.1} parent=0
    _
  %s8 = ssub.s32 1, %s6
  %s9 = scalar_select 0, %s8, %s6
  $region1: #{tpu_custom_call.1} parent=0
    #allocation3 [shape = 'u8[12288]{0}', space=vmem, size = 0x3000, scoped, tag = 'input window, operand 0']
    #allocation4 [shape = 's32[2]{0}', space=sflag, size = 0x8, scoped, tag = 'scoped memory for tpu_custom_call.1']
    #allocation5 [shape = 's32[2]{0}', space=sflag, size = 0x8, scoped, tag = 'scoped memory for tpu_custom_call.1']
    #allocation6 [shape = 'u8[8192]{0}', space=vmem, size = 0x2000, scoped, tag = 'output window, operand 0']
    %10 = vsyncpa [#allocation4], 0
    %s11 = scalar_lea.sflag [#allocation4], 1
    %12 = vsyncpa %s11, 0
    %13 = vsyncpa [#allocation5], 0
    %s14 = scalar_lea.sflag [#allocation5], 1
    %15 = vsyncpa %s14, 0
    loop: start=0, step=1, limit=4
    $region2: #{tpu_custom_call.1} parent=1 // loop_pre_header
      _
    $region3: #{tpu_custom_call.1} parent=1 // loop_header
      %s17 = sphi 0, %s21
      %p18 = scmp.ge.s32.totalorder %s17, 4
      %s27 = sphi 0, %s29
      %s30 = sphi 0, %s27
      %s31 = sphi 0, %s30
      %s47 = sphi 0, %s31
      %s51 = sphi 0, %s51
      %s53 = sphi 0, %s51
      %s54 = sphi 0, %s53
      %s68 = sphi 0, %s54
      %s72 = sphi 0, %s72
      %s74 = sphi 0, %s72
      %s75 = sphi 0, %s74
      %s89 = sphi 0, %s75
      %s93 = sphi 0, %s93
      %s95 = sphi 0, %s93
      %s96 = sphi 0, %s95
      %s110 = sphi 0, %s96
      %s114 = sphi 0, %s114
      %s116 = sphi 0, %s114
      %s117 = sphi 0, %s116
      %s131 = sphi 0, %s117
      %s137 = sphi 0, %s139
      %s140 = sphi 0, %s137
      %s141 = sphi 0, %s140
      %s157 = sphi 0, %s141
    $region4: #{tpu_custom_call.1} parent=1 // loop_header_branch
      %20 = sbr.rel (%p18) target = $region8
    $region5: #{tpu_custom_call.1} parent=1 // loop_body
      %s22 = ssub.s32 %s17, 1
      %s23 = ssub.s32 %s17, 2
      %s24 = sadd.s32 %s17, 1
      %s25 = ssub.s32 %s17, %s24
      %p26 = scmp.eq.s32.totalorder %s25, 0
      %s28 = sadd.s32 %s27, 1
      %s29 = scalar_select %p26, %s27, %s28
      %p32 = pneg %p26
      %p33 = scmp.eq.s32.totalorder %s17, 1
      %p34 = por %p32, %p33
      %p35 = scmp.ne.s32.totalorder %s27, %s30
      %p36 = scmp.eq.s32.totalorder %s17, 0
      %p37 = por %p35, %p36
      %p38 = scmp.ne.s32.totalorder %s27, %s30
      %p39 = scmp.eq.s32.totalorder %s22, 1
      %p40 = por %p38, %p39
      %p41 = scmp.ne.s32.totalorder %s30, %s31
      %p42 = scmp.eq.s32.totalorder %s22, 0
      %p43 = por %p41, %p42
      %p44 = scmp.ne.s32.totalorder %s30, %s31
      %p45 = scmp.eq.s32.totalorder %s23, 1
      %p46 = por %p44, %p45
      %p48 = scmp.ne.s32.totalorder %s31, %s47
      %p49 = scmp.eq.s32.totalorder %s23, 0
      %p50 = por %p48, %p49
      %s52 = sadd.s32 %s51, 1
      %p55 = scmp.eq.s32.totalorder %s17, 1
      %p56 = scmp.ne.s32.totalorder %s51, %s53
      %p57 = scmp.eq.s32.totalorder %s17, 0
      %p58 = por %p56, %p57
      %p59 = scmp.ne.s32.totalorder %s51, %s53
      %p60 = scmp.eq.s32.totalorder %s22, 1
      %p61 = por %p59, %p60
      %p62 = scmp.ne.s32.totalorder %s53, %s54
      %p63 = scmp.eq.s32.totalorder %s22, 0
      %p64 = por %p62, %p63
      %p65 = scmp.ne.s32.totalorder %s53, %s54
      %p66 = scmp.eq.s32.totalorder %s23, 1
      %p67 = por %p65, %p66
      %p69 = scmp.ne.s32.totalorder %s54, %s68
      %p70 = scmp.eq.s32.totalorder %s23, 0
      %p71 = por %p69, %p70
      %s73 = sadd.s32 %s72, 1
      %p76 = scmp.eq.s32.totalorder %s17, 1
      %p77 = scmp.ne.s32.totalorder %s72, %s74
      %p78 = scmp.eq.s32.totalorder %s17, 0
      %p79 = por %p77, %p78
      %p80 = scmp.ne.s32.totalorder %s72, %s74
      %p81 = scmp.eq.s32.totalorder %s22, 1
      %p82 = por %p80, %p81
      %p83 = scmp.ne.s32.totalorder %s74, %s75
      %p84 = scmp.eq.s32.totalorder %s22, 0
      %p85 = por %p83, %p84
      %p86 = scmp.ne.s32.totalorder %s74, %s75
      %p87 = scmp.eq.s32.totalorder %s23, 1
      %p88 = por %p86, %p87
      %p90 = scmp.ne.s32.totalorder %s75, %s89
      %p91 = scmp.eq.s32.totalorder %s23, 0
      %p92 = por %p90, %p91
      %s94 = sadd.s32 %s93, 1
      %p97 = scmp.eq.s32.totalorder %s17, 1
      %p98 = scmp.ne.s32.totalorder %s93, %s95
      %p99 = scmp.eq.s32.totalorder %s17, 0
      %p100 = por %p98, %p99
      %p101 = scmp.ne.s32.totalorder %s93, %s95
      %p102 = scmp.eq.s32.totalorder %s22, 1
      %p103 = por %p101, %p102
      %p104 = scmp.ne.s32.totalorder %s95, %s96
      %p105 = scmp.eq.s32.totalorder %s22, 0
      %p106 = por %p104, %p105
      %p107 = scmp.ne.s32.totalorder %s95, %s96
      %p108 = scmp.eq.s32.totalorder %s23, 1
      %p109 = por %p107, %p108
      %p111 = scmp.ne.s32.totalorder %s96, %s110
      %p112 = scmp.eq.s32.totalorder %s23, 0
      %p113 = por %p111, %p112
      %s115 = sadd.s32 %s114, 1
      %p118 = scmp.eq.s32.totalorder %s17, 1
      %p119 = scmp.ne.s32.totalorder %s114, %s116
      %p120 = scmp.eq.s32.totalorder %s17, 0
      %p121 = por %p119, %p120
      %p122 = scmp.ne.s32.totalorder %s114, %s116
      %p123 = scmp.eq.s32.totalorder %s22, 1
      %p124 = por %p122, %p123
      %p125 = scmp.ne.s32.totalorder %s116, %s117
      %p126 = scmp.eq.s32.totalorder %s22, 0
      %p127 = por %p125, %p126
      %p128 = scmp.ne.s32.totalorder %s116, %s117
      %p129 = scmp.eq.s32.totalorder %s23, 1
      %p130 = por %p128, %p129
      %p132 = scmp.ne.s32.totalorder %s117, %s131
      %p133 = scmp.eq.s32.totalorder %s23, 0
      %p134 = por %p132, %p133
      %s135 = ssub.s32 %s17, %s24
      %p136 = scmp.eq.s32.totalorder %s135, 0
      %s138 = sadd.s32 %s137, 1
      %s139 = scalar_select %p136, %s137, %s138
      %p142 = pneg %p136
      %p143 = scmp.eq.s32.totalorder %s17, 1
      %p144 = por %p142, %p143
      %p145 = scmp.ne.s32.totalorder %s137, %s140
      %p146 = scmp.eq.s32.totalorder %s17, 0
      %p147 = por %p145, %p146
      %p148 = scmp.ne.s32.totalorder %s137, %s140
      %p149 = scmp.eq.s32.totalorder %s22, 1
      %p150 = por %p148, %p149
      %p151 = scmp.ne.s32.totalorder %s140, %s141
      %p152 = scmp.eq.s32.totalorder %s22, 0
      %p153 = por %p151, %p152
      %p154 = scmp.ne.s32.totalorder %s140, %s141
      %p155 = scmp.eq.s32.totalorder %s23, 1
      %p156 = por %p154, %p155
      %p158 = scmp.ne.s32.totalorder %s141, %s157
      %p159 = scmp.eq.s32.totalorder %s23, 0
      %p160 = por %p158, %p159
      %p161 = scmp.le.s32.totalorder 1, %s17
      %p162 = scmp.lt.s32.totalorder %s17, 3
      %p163 = pnand %p161, %p162
      %p164 = pneg %p163
      // Predicated region
      $region9: #{tpu_custom_call.1} parent=5 // pred_check
        _
      $region10: #{tpu_custom_call.1} parent=5 // pred_check_branch
        %166 = sbr.rel (%p163) target = $region12
      $region11: #{tpu_custom_call.1} parent=5 // pred_region
        %s167 = ssub.s32 %s17, 1
        // Predicated region
        $region13: #{tpu_custom_call.1} parent=11 // pred_check
          %p168 = pneg %p64
        $region14: #{tpu_custom_call.1} parent=11 // pred_check_branch
          %170 = sbr.rel (%p168) target = $region16
        $region15: #{tpu_custom_call.1} parent=11 // pred_region
          _
        $region16: #{tpu_custom_call.1} parent=11 // pred_fallthru
          _
        // Predicated region
        $region17: #{tpu_custom_call.1} parent=11 // pred_check
          %p171 = pneg %p85
        $region18: #{tpu_custom_call.1} parent=11 // pred_check_branch
          %173 = sbr.rel (%p171) target = $region20
        $region19: #{tpu_custom_call.1} parent=11 // pred_region
          _
        $region20: #{tpu_custom_call.1} parent=11 // pred_fallthru
          _
        // Predicated region
        $region21: #{tpu_custom_call.1} parent=11 // pred_check
          %p174 = pneg %p106
        $region22: #{tpu_custom_call.1} parent=11 // pred_check_branch
          %176 = sbr.rel (%p174) target = $region24
        $region23: #{tpu_custom_call.1} parent=11 // pred_region
          _
        $region24: #{tpu_custom_call.1} parent=11 // pred_fallthru
          _
        // Predicated region
        $region25: #{tpu_custom_call.1} parent=11 // pred_check
          %p177 = pneg %p127
        $region26: #{tpu_custom_call.1} parent=11 // pred_check_branch
          %179 = sbr.rel (%p177) target = $region28
        $region27: #{tpu_custom_call.1} parent=11 // pred_region
          _
        $region28: #{tpu_custom_call.1} parent=11 // pred_fallthru
          _
      $region12: #{tpu_custom_call.1} parent=5 // pred_fallthru
        _
      %p180 = scmp.lt.s32.totalorder %s17, 2
      // Predicated region
      $region29: #{tpu_custom_call.1} parent=5 // pred_check
        %p181 = pneg %p180
      $region30: #{tpu_custom_call.1} parent=5 // pred_check_branch
        %183 = sbr.rel (%p181) target = $region32
      $region31: #{tpu_custom_call.1} parent=5 // pred_region
        // Predicated region
        $region33: #{tpu_custom_call.1} parent=31 // pred_check
          %p184 = pneg %p37
        $region34: #{tpu_custom_call.1} parent=31 // pred_check_branch
          %186 = sbr.rel (%p184) target = $region36
        $region35: #{tpu_custom_call.1} parent=31 // pred_region
          %s187 = sand.u32 %s27, 1
          %s188 = scalar_lea.sflag [#allocation4], %s187
          %s189 = sand.u32 %s27, 1
          %s190 = smul.addr %s189, 12
          %s191 = scalar_lea.vmem [#allocation3], %s190
          %s193 = ssub.s32 192, 192
          %194 = vsyncadd %s188, %s193
          %s195 = smul.addr %s17, 3
          %s196 = smul.addr %s195, 64
          %s197 = scalar_lea.hbm %s0, %s196
          %s199 = sshll.u32 %s191, 4
          %s200 = int_to_ptr.vmem [resolvable:$true] %s199
          %202 = dma.hbm_to_vmem [thread:$0]  %s197, 192, %s200, %s188
        $region36: #{tpu_custom_call.1} parent=31 // pred_fallthru
          _
      $region32: #{tpu_custom_call.1} parent=5 // pred_fallthru
        _
      %p203 = scmp.le.s32.totalorder 1, %s17
      %p204 = scmp.lt.s32.totalorder %s17, 3
      %p205 = pnand %p203, %p204
      %p206 = pneg %p205
      // Predicated region
      $region37: #{tpu_custom_call.1} parent=5 // pred_check
        _
      $region38: #{tpu_custom_call.1} parent=5 // pred_check_branch
        %208 = sbr.rel (%p205) target = $region40
      $region39: #{tpu_custom_call.1} parent=5 // pred_region
        %s209 = ssub.s32 %s17, 1
        %s210 = sand.u32 %s30, 1
        %s211 = scalar_lea.sflag [#allocation4], %s210
        %s212 = sand.u32 %s30, 1
        %s213 = smul.addr %s212, 12
        %s214 = scalar_lea.vmem [#allocation3], %s213
        // Predicated region
        $region41: #{tpu_custom_call.1} parent=39 // pred_check
          %p215 = pneg %p43
        $region42: #{tpu_custom_call.1} parent=39 // pred_check_branch
          %217 = sbr.rel (%p215) target = $region44
        $region43: #{tpu_custom_call.1} parent=39 // pred_region
          %218 = dma.done %s211, 192
        $region44: #{tpu_custom_call.1} parent=39 // pred_fallthru
          _
        %s219 = sand.u32 %s30, 1
        %s220 = scalar_lea.sflag [#allocation4], %s219
        %s221 = sand.u32 %s30, 1
        %s222 = smul.addr %s221, 12
        %s223 = scalar_lea.vmem [#allocation3], %s222
        %p224 = pneg %p43
        %p225 = pneg %p40
        %p226 = pneg %p64
        %p227 = pneg %p61
        %p228 = pneg %p85
        %p229 = pneg %p82
        %p230 = pneg %p106
        %p231 = pneg %p103
        %p232 = pneg %p127
        %p233 = pneg %p124
        %p234 = pneg %p153
        %p235 = pneg %p150
        %s236 = sand.u32 %s140, 1
        %s237 = scalar_lea.sflag [#allocation5], %s236
        %s238 = sand.u32 %s140, 1
        %s239 = smul.addr %s238, 8
        %s240 = scalar_lea.vmem [#allocation6], %s239
        %v241 = vlaneseq
        %v242 = vand.u32 %v241, 127
        %v243 = vadd.s32 %v242, 128
        %vm244 = vcmp.lt.s32.totalorder %v242, 0
        %v245 = vsub.s32 0, %v242
        %v246 = vsel %vm244, %v245, %v242
        %v247 = vshrl.u32 %v246, 4
        %v248 = vand.u32 %v246, 15
        %v249 = vsub.s32 0, %v248
        %v250 = vsel %vm244, %v249, %v248
        %vm251 = vcmp.lt.s32.totalorder %v243, 0
        %v252 = vsub.s32 0, %v243
        %v253 = vsel %vm251, %v252, %v243
        %v254 = vshrl.u32 %v253, 4
        %v255 = vand.u32 %v253, 15
        %v256 = vsub.s32 0, %v255
        %v257 = vsel %vm251, %v256, %v255
        %vm258 = vcmp.ne.s32.totalorder %v250, 0
        %vm259 = vcmp.ne.s32.totalorder %v257, 0
        %vm260 = vcmp.lt.s32.totalorder %v250, 0
        %vm261 = vcmp.lt.s32.totalorder %v257, 0
        %vm262 = vmand %vm260, %vm258
        %vm263 = vmand %vm261, %vm259
        %v264 = vadd.s32 %v250, 16
        %v265 = vadd.s32 %v257, 16
        %v266 = vsel %vm262, %v264, %v250
        %v267 = vsel %vm263, %v265, %v257
        %v268 = vadd.s32 %v266, 4294967295
        %v269 = vadd.s32 %v267, 4294967295
        %vm270 = vcmp.ge.s32.totalorder %v268, 0
        %vm271 = vcmp.ge.s32.totalorder %v269, 0
        %vm272 = vcmp.lt.s32.totalorder %v268, 16
        %vm273 = vcmp.lt.s32.totalorder %v269, 16
        %vm274 = vmand %vm270, %vm272
        %vm275 = vmand %vm271, %vm273
        %v276 = vadd.s32 %v266, 1
        %v277 = vadd.s32 %v267, 1
        %vm278 = vcmp.ge.s32.totalorder %v276, 0
        %vm279 = vcmp.ge.s32.totalorder %v277, 0
        %vm280 = vcmp.lt.s32.totalorder %v276, 16
        %vm281 = vcmp.lt.s32.totalorder %v277, 16
        %vm282 = vmand %vm278, %vm280
        %vm283 = vmand %vm279, %vm281
        %v284 = vld [vmem:[%s214] sm:$0xff]
        %v285 = vsel %vm274, 1, 0
        %v286 = vsel %vm275, 1, 0
        %vm287 = vcmp.eq.s32.totalorder %v285, 1
        %vm288 = vcmp.eq.s32.totalorder %v286, 1
        %v290 = vcombine.high %v284, %v284
        %v292 = vsel %vm287, %v284, 0.0
        %v293 = vsel %vm288, %v290, 0.0
        %v294 = vld [vmem:[%s1] sm:$0xf]
        %296 = vset.pattern.permute.xlu0 0
        %297 = vperm.xlu0 %296, %v294
        %v298 = vpop.permute.xlu0 %297
        %v300 = vmul.f32 %v292, %v298
        %v301 = vmul.f32 %v293, %v298
        %v302 = vadd.f32 %v300, 0.0
        %v303 = vadd.f32 %v301, 0.0
        %v304 = vld [vmem:[%s214] sm:$0xff]
        %v305 = vld [vmem:[%s214 + $0x8] sm:$0xf]
        %306 = vset.pattern.permute.xlu0 1
        %307 = vperm.xlu0 %306, %v294
        %v308 = vpop.permute.xlu0 %307
        %v310 = vunpack.c.l.s4 839922192
        %v311 = vunpack.c.0.s8 %v310
        %v312 = vlaneseq
        %v313 = vshrl.u32 %v312, 7
        %v314 = vsub.s32 %v311, %v313
        %v315 = vrot.slane %v308, %v314
        %v317 = vmul.f32 %v304, %v315
        %v318 = vmul.f32 %v305, %v315
        %v321 = vcombine.high %v317, %v317
        %322 = vrot.lane.b32.xlu0 %v317, 127
        %v323 = vpop.permute.xlu0 %322
        %324 = vrot.lane.b32.xlu0 %v321, 127
        %v325 = vpop.permute.xlu0 %324
        %326 = vrot.lane.b32.xlu0 %v318, 127
        %v327 = vpop.permute.xlu0 %326
        %vm328 = vcmask 1039360
        %v329 = vsel %vm328, %v323, %v325
        %v330 = vsel %vm328, %v325, %v327
        %v333 = vadd.f32 %v302, %v329
        %v334 = vadd.f32 %v303, %v330
        %v335 = vld [vmem:[%s214] sm:$0xff]
        %v336 = vld [vmem:[%s214 + $0x8] sm:$0xf]
        %v337 = vsel %vm282, 1, 0
        %v338 = vsel %vm283, 1, 0
        %vm339 = vcmp.eq.s32.totalorder %v337, 1
        %vm340 = vcmp.eq.s32.totalorder %v338, 1
        %v343 = vcombine.high %v335, %v335
        %344 = vrot.lane.b32.xlu0 %v335, 126
        %v345 = vpop.permute.xlu0 %344
        %346 = vrot.lane.b32.xlu0 %v343, 126
        %v347 = vpop.permute.xlu0 %346
        %348 = vrot.lane.b32.xlu0 %v336, 126
        %v349 = vpop.permute.xlu0 %348
        %vm350 = vcmask 1031168
        %v351 = vsel %vm350, %v345, %v347
        %v352 = vsel %vm350, %v347, %v349
        %v355 = vsel %vm339, %v351, 0.0
        %v356 = vsel %vm340, %v352, 0.0
        %v357 = vld [vmem:[%s1] sm:$0xf]
        %359 = vset.pattern.permute.xlu0 2
        %360 = vperm.xlu0 %359, %v357
        %v361 = vpop.permute.xlu0 %360
        %v363 = vmul.f32 %v355, %v361
        %v364 = vmul.f32 %v356, %v361
        %v365 = vadd.f32 %v333, %v363
        %v366 = vadd.f32 %v334, %v364
        %v367 = vld [vmem:[%s214] sm:$0xff]
        %v368 = vld [vmem:[%s214 + $0x8] sm:$0xf]
        %v371 = vcombine.high %v367, %v367
        %372 = vrot.lane.b32.xlu0 %v367, 112
        %v373 = vpop.permute.xlu0 %372
        %374 = vrot.lane.b32.xlu0 %v371, 112
        %v375 = vpop.permute.xlu0 %374
        %376 = vrot.lane.b32.xlu0 %v368, 112
        %v377 = vpop.permute.xlu0 %376
        %vm378 = vcmask 916480
        %v379 = vsel %vm378, %v373, %v375
        %v380 = vsel %vm378, %v375, %v377
        %v383 = vsel %vm287, %v379, 0.0
        %v384 = vsel %vm288, %v380, 0.0
        %v385 = vld [vmem:[%s1] sm:$0xf]
        %387 = vset.pattern.permute.xlu0 3
        %388 = vperm.xlu0 %387, %v385
        %v389 = vpop.permute.xlu0 %388
        %v391 = vmul.f32 %v383, %v389
        %v392 = vmul.f32 %v384, %v389
        %v393 = vadd.f32 %v365, %v391
        %v394 = vadd.f32 %v366, %v392
        %v395 = vld [vmem:[%s214] sm:$0xff]
        %v396 = vld [vmem:[%s214 + $0x8] sm:$0xf]
        %397 = vset.pattern.permute.xlu0 4
        %398 = vperm.xlu0 %397, %v385
        %v399 = vpop.permute.xlu0 %398
        %v401 = vunpack.c.l.s4 839922192
        %v402 = vunpack.c.0.s8 %v401
        %v403 = vlaneseq
        %v404 = vshrl.u32 %v403, 7
        %v405 = vsub.s32 %v402, %v404
        %v406 = vrot.slane %v399, %v405
        %v408 = vmul.f32 %v395, %v406
        %v409 = vmul.f32 %v396, %v406
        %v412 = vcombine.high %v408, %v408
        %413 = vrot.lane.b32.xlu0 %v408, 111
        %v414 = vpop.permute.xlu0 %413
        %415 = vrot.lane.b32.xlu0 %v412, 111
        %v416 = vpop.permute.xlu0 %415
        %417 = vrot.lane.b32.xlu0 %v409, 111
        %v418 = vpop.permute.xlu0 %417
        %vm419 = vcmask 908288
        %v420 = vsel %vm419, %v414, %v416
        %v421 = vsel %vm419, %v416, %v418
        %v424 = vadd.f32 %v393, %v420
        %v425 = vadd.f32 %v394, %v421
        %v426 = vld [vmem:[%s214] sm:$0xff]
        %v427 = vld [vmem:[%s214 + $0x8] sm:$0xf]
        %v430 = vcombine.high %v426, %v426
        %431 = vrot.lane.b32.xlu0 %v426, 110
        %v432 = vpop.permute.xlu0 %431
        %433 = vrot.lane.b32.xlu0 %v430, 110
        %v434 = vpop.permute.xlu0 %433
        %435 = vrot.lane.b32.xlu0 %v427, 110
        %v436 = vpop.permute.xlu0 %435
        %vm437 = vcmask 900096
        %v438 = vsel %vm437, %v432, %v434
        %v439 = vsel %vm437, %v434, %v436
        %v442 = vsel %vm339, %v438, 0.0
        %v443 = vsel %vm340, %v439, 0.0
        %v444 = vld [vmem:[%s1] sm:$0xf]
        %446 = vset.pattern.permute.xlu0 5
        %447 = vperm.xlu0 %446, %v444
        %v448 = vpop.permute.xlu0 %447
        %v450 = vmul.f32 %v442, %v448
        %v451 = vmul.f32 %v443, %v448
        %v452 = vadd.f32 %v424, %v450
        %v453 = vadd.f32 %v425, %v451
        %v454 = vld [vmem:[%s214] sm:$0xff]
        %v455 = vld [vmem:[%s214 + $0x8] sm:$0xf]
        %v458 = vcombine.high %v454, %v454
        %459 = vrot.lane.b32.xlu0 %v454, 96
        %v460 = vpop.permute.xlu0 %459
        %461 = vrot.lane.b32.xlu0 %v458, 96
        %v462 = vpop.permute.xlu0 %461
        %463 = vrot.lane.b32.xlu0 %v455, 96
        %v464 = vpop.permute.xlu0 %463
        %vm465 = vcmask 785408
        %v466 = vsel %vm465, %v460, %v462
        %v467 = vsel %vm465, %v462, %v464
        %v470 = vsel %vm287, %v466, 0.0
        %v471 = vsel %vm288, %v467, 0.0
        %v472 = vld [vmem:[%s1] sm:$0xf]
        %474 = vset.pattern.permute.xlu0 6
        %475 = vperm.xlu0 %474, %v472
        %v476 = vpop.permute.xlu0 %475
        %v478 = vmul.f32 %v470, %v476
        %v479 = vmul.f32 %v471, %v476
        %v480 = vadd.f32 %v452, %v478
        %v481 = vadd.f32 %v453, %v479
        %v482 = vld [vmem:[%s214] sm:$0xff]
        %v483 = vld [vmem:[%s214 + $0x8] sm:$0xf]
        %484 = vset.pattern.permute.xlu0 7
        %485 = vperm.xlu0 %484, %v472
        %v486 = vpop.permute.xlu0 %485
        %v488 = vunpack.c.l.s4 839922192
        %v489 = vunpack.c.0.s8 %v488
        %v490 = vlaneseq
        %v491 = vshrl.u32 %v490, 7
        %v492 = vsub.s32 %v489, %v491
        %v493 = vrot.slane %v486, %v492
        %v495 = vmul.f32 %v482, %v493
        %v496 = vmul.f32 %v483, %v493
        %v499 = vcombine.high %v495, %v495
        %500 = vrot.lane.b32.xlu0 %v495, 95
        %v501 = vpop.permute.xlu0 %500
        %502 = vrot.lane.b32.xlu0 %v499, 95
        %v503 = vpop.permute.xlu0 %502
        %504 = vrot.lane.b32.xlu0 %v496, 95
        %v505 = vpop.permute.xlu0 %504
        %vm506 = vcmask 777216
        %v507 = vsel %vm506, %v501, %v503
        %v508 = vsel %vm506, %v503, %v505
        %v511 = vadd.f32 %v480, %v507
        %v512 = vadd.f32 %v481, %v508
        %v513 = vld [vmem:[%s214] sm:$0xff]
        %v514 = vld [vmem:[%s214 + $0x8] sm:$0xf]
        %v517 = vcombine.high %v513, %v513
        %518 = vrot.lane.b32.xlu0 %v513, 94
        %v519 = vpop.permute.xlu0 %518
        %520 = vrot.lane.b32.xlu0 %v517, 94
        %v521 = vpop.permute.xlu0 %520
        %522 = vrot.lane.b32.xlu0 %v514, 94
        %v523 = vpop.permute.xlu0 %522
        %vm524 = vcmask 769024
        %v525 = vsel %vm524, %v519, %v521
        %v526 = vsel %vm524, %v521, %v523
        %v529 = vsel %vm339, %v525, 0.0
        %v530 = vsel %vm340, %v526, 0.0
        %v531 = vld [vmem:[%s1] sm:$0xf]
        %533 = vset.pattern.permute.xlu0 8
        %534 = vperm.xlu0 %533, %v531
        %v535 = vpop.permute.xlu0 %534
        %v537 = vmul.f32 %v529, %v535
        %v538 = vmul.f32 %v530, %v535
        %v539 = vadd.f32 %v511, %v537
        %v540 = vadd.f32 %v512, %v538
        %v541 = vld [vmem:[%s2] sm:$0xff]
        %vm542 = vcmask 31744
        %v544 = vsel %vm542, %v541, 0
        %vm546 = vcmask 1043456
        %v548 = vsel %vm546, %v539, 0
        %v551 = vsel %vm546, %v540, 0
        %553 = vmatprep.subr.mxu0 %v551
        %554 = vmatpush1.msra.mxu0 %v548
        %555 = vmatprep.subr.mxu0 0.0
        %556 = vmatpush1.msra.mxu0 0.0
        %557 = vmatprep.subr.mxu0 0.0
        %558 = vmatpush1.msra.mxu0 0.0
        %559 = vmatprep.subr.mxu0 0.0
        %560 = vmatpush1.msra.mxu0 0.0
        %561 = vmatprep.subr.mxu0 0.0
        %562 = vmatpush1.msra.mxu0 0.0
        %563 = vmatprep.subr.mxu0 0.0
        %564 = vmatpush1.msra.mxu0 0.0
        %565 = vmatprep.subr.mxu0 0.0
        %566 = vmatpush1.msra.mxu0 0.0
        %567 = vmatprep.subr.mxu0 0.0
        %568 = vmatpush1.msra.mxu0 0.0
        %569 = vmatprep.subr.mxu0 0.0
        %570 = vmatpush1.msra.mxu0 0.0
        %571 = vmatprep.subr.mxu0 0.0
        %572 = vmatpush1.msra.mxu0 0.0
        %573 = vmatprep.subr.mxu0 0.0
        %574 = vmatpush1.msra.mxu0 0.0
        %575 = vmatprep.subr.mxu0 0.0
        %576 = vmatpush1.msra.mxu0 0.0
        %577 = vmatprep.subr.mxu0 0.0
        %578 = vmatpush1.msra.mxu0 0.0
        %579 = vmatprep.subr.mxu0 0.0
        %580 = vmatpush1.msra.mxu0 0.0
        %581 = vmatprep.subr.mxu0 0.0
        %582 = vmatpush1.msra.mxu0 0.0
        %583 = vmatprep.subr.mxu0 0.0
        %584 = vmatpush1.msra.mxu0 0.0
        %585 = vmatprep.subr.mxu0 0.0
        %586 = vmatpush1.msra.mxu0 0.0
        %587 = vmatprep.subr.mxu0 0.0
        %588 = vmatpush1.msra.mxu0 0.0
        %589 = vmatprep.subr.mxu0 0.0
        %590 = vmatpush1.msra.mxu0 0.0
        %591 = vmatprep.subr.mxu0 0.0
        %592 = vmatpush1.msra.mxu0 0.0
        %593 = vmatprep.subr.mxu0 0.0
        %594 = vmatpush1.msra.mxu0 0.0
        %595 = vmatprep.subr.mxu0 0.0
        %596 = vmatpush1.msra.mxu0 0.0
        %597 = vmatprep.subr.mxu0 0.0
        %598 = vmatpush1.msra.mxu0 0.0
        %599 = vmatprep.subr.mxu0 0.0
        %600 = vmatpush1.msra.mxu0 0.0
        %601 = vmatprep.subr.mxu0 0.0
        %602 = vmatpush1.msra.mxu0 0.0
        %603 = vmatprep.subr.mxu0 0.0
        %604 = vmatpush1.msra.mxu0 0.0
        %605 = vmatprep.subr.mxu0 0.0
        %606 = vmatpush1.msra.mxu0 0.0
        %607 = vmatprep.subr.mxu0 0.0
        %608 = vmatpush1.msra.mxu0 0.0
        %609 = vmatprep.subr.mxu0 0.0
        %610 = vmatpush1.msra.mxu0 0.0
        %611 = vmatprep.subr.mxu0 0.0
        %612 = vmatpush1.msra.mxu0 0.0
        %613 = vmatprep.subr.mxu0 0.0
        %614 = vmatpush1.msra.mxu0 0.0
        %615 = vmatprep.subr.mxu0 0.0
        %616 = vmatpush1.msra.mxu0 0.0
        %617 = vmatprep.mubr.f32.mxu0 0.0
        %618 = vmatmul.mubr.f32.gmra.mrb[0].mxu0 %v544
        %v619 = vpop.f32.mrb[0].mxu0
        %v620 = vadd.f32 0.0, %v619
        %v621 = vpop.f32.mrb[0].mxu0
        %v622 = vadd.f32 0.0, %v621
        %623 = vdwg.mxu0
        %vm624 = vcmp.gt.f32.partialorder %v620, 0.0
        %vm625 = vcmp.gt.f32.partialorder %v622, 0.0
        %v626 = vmul.f32 %v620, 0.01
        %v627 = vmul.f32 %v622, 0.01
        %v628 = vsel %vm624, %v620, %v626
        %v629 = vsel %vm625, %v622, %v627
        %630 = vst [vmem:[#allocation2] sm:$0xff] 0.0
        %631 = vst [vmem:[#allocation2 + $0x8] sm:$0xff] 0.0
        %vm632 = vcmask 277504
        %633 = vst.msk [vmem:[#allocation2 + $0x10] sm:$0xff] %vm632, 0.0
        %636 = vrot.lane.b32.xlu0 %v628, 17
        %v637 = vpop.permute.xlu0 %636
        %638 = vrot.lane.b32.xlu0 %v629, 17
        %v639 = vpop.permute.xlu0 %638
        %vm640 = vcmask 138240
        %v641 = vsel %vm640, %v637, %v639
        %vm645 = vcmask 1047688
        %646 = vst.msk [vmem:[#allocation2] sm:$0xff] %vm645, %v637
        %647 = vst [vmem:[#allocation2 + $0x8] sm:$0xff] %v641
        %648 = vst.msk [vmem:[#allocation2 + $0x10] sm:$0xff] %vm640, %v639
        %v649 = vld [vmem:[#allocation2] sm:$0xff]
        %v650 = vld [vmem:[#allocation2 + $0x8] sm:$0xff]
        %v651 = vsel %vm287, %v649, 0.0
        %v652 = vsel %vm288, %v650, 0.0
        %v653 = vld [vmem:[%s3] sm:$0xff]
        %655 = vset.pattern.permute.xlu0 0
        %656 = vperm.xlu0 %655, %v653
        %v657 = vpop.permute.xlu0 %656
        %v659 = vmul.f32 %v651, %v657
        %v660 = vmul.f32 %v652, %v657
        %v661 = vadd.f32 %v659, 0.0
        %v662 = vadd.f32 %v660, 0.0
        %v663 = vld [vmem:[#allocation2] sm:$0xff]
        %v664 = vld [vmem:[#allocation2 + $0x8] sm:$0xff]
        %v665 = vld [vmem:[#allocation2 + $0x10] sm:$0xff]
        %666 = vset.pattern.permute.xlu0 1
        %667 = vperm.xlu0 %666, %v653
        %v668 = vpop.permute.xlu0 %667
        %v670 = vmul.f32 %v663, %v668
        %v671 = vmul.f32 %v664, %v668
        %v672 = vmul.f32 %v665, %v668
        %676 = vrot.lane.b32.xlu0 %v670, 127
        %v677 = vpop.permute.xlu0 %676
        %678 = vrot.lane.b32.xlu0 %v671, 127
        %v679 = vpop.permute.xlu0 %678
        %680 = vrot.lane.b32.xlu0 %v672, 127
        %v681 = vpop.permute.xlu0 %680
        %v682 = vsel %vm328, %v677, %v679
        %v683 = vsel %vm328, %v679, %v681
        %v686 = vadd.f32 %v661, %v682
        %v687 = vadd.f32 %v662, %v683
        %691 = vrot.lane.b32.xlu0 %v663, 126
        %v692 = vpop.permute.xlu0 %691
        %693 = vrot.lane.b32.xlu0 %v664, 126
        %v694 = vpop.permute.xlu0 %693
        %695 = vrot.lane.b32.xlu0 %v665, 126
        %v696 = vpop.permute.xlu0 %695
        %v697 = vsel %vm350, %v692, %v694
        %v698 = vsel %vm350, %v694, %v696
        %v701 = vsel %vm339, %v697, 0.0
        %v702 = vsel %vm340, %v698, 0.0
        %703 = vset.pattern.permute.xlu0 2
        %704 = vperm.xlu0 %703, %v653
        %v705 = vpop.permute.xlu0 %704
        %v707 = vmul.f32 %v701, %v705
        %v708 = vmul.f32 %v702, %v705
        %v709 = vadd.f32 %v686, %v707
        %v710 = vadd.f32 %v687, %v708
        %711 = vrot.lane.b32.xlu0 %v663, 112
        %v712 = vpop.permute.xlu0 %711
        %713 = vrot.lane.b32.xlu0 %v664, 112
        %v714 = vpop.permute.xlu0 %713
        %715 = vrot.lane.b32.xlu0 %v665, 112
        %v716 = vpop.permute.xlu0 %715
        %v717 = vsel %vm378, %v712, %v714
        %v718 = vsel %vm378, %v714, %v716
        %v721 = vsel %vm287, %v717, 0.0
        %v722 = vsel %vm288, %v718, 0.0
        %723 = vset.pattern.permute.xlu0 3
        %724 = vperm.xlu0 %723, %v653
        %v725 = vpop.permute.xlu0 %724
        %v727 = vmul.f32 %v721, %v725
        %v728 = vmul.f32 %v722, %v725
        %v729 = vadd.f32 %v709, %v727
        %v730 = vadd.f32 %v710, %v728
        %731 = vset.pattern.permute.xlu0 4
        %732 = vperm.xlu0 %731, %v653
        %v733 = vpop.permute.xlu0 %732
        %v735 = vmul.f32 %v663, %v733
        %v736 = vmul.f32 %v664, %v733
        %v737 = vmul.f32 %v665, %v733
        %741 = vrot.lane.b32.xlu0 %v735, 111
        %v742 = vpop.permute.xlu0 %741
        %743 = vrot.lane.b32.xlu0 %v736, 111
        %v744 = vpop.permute.xlu0 %743
        %745 = vrot.lane.b32.xlu0 %v737, 111
        %v746 = vpop.permute.xlu0 %745
        %v747 = vsel %vm419, %v742, %v744
        %v748 = vsel %vm419, %v744, %v746
        %v751 = vadd.f32 %v729, %v747
        %v752 = vadd.f32 %v730, %v748
        %753 = vrot.lane.b32.xlu0 %v663, 110
        %v754 = vpop.permute.xlu0 %753
        %755 = vrot.lane.b32.xlu0 %v664, 110
        %v756 = vpop.permute.xlu0 %755
        %757 = vrot.lane.b32.xlu0 %v665, 110
        %v758 = vpop.permute.xlu0 %757
        %v759 = vsel %vm437, %v754, %v756
        %v760 = vsel %vm437, %v756, %v758
        %v763 = vsel %vm339, %v759, 0.0
        %v764 = vsel %vm340, %v760, 0.0
        %765 = vset.pattern.permute.xlu0 5
        %766 = vperm.xlu0 %765, %v653
        %v767 = vpop.permute.xlu0 %766
        %v769 = vmul.f32 %v763, %v767
        %v770 = vmul.f32 %v764, %v767
        %v771 = vadd.f32 %v751, %v769
        %v772 = vadd.f32 %v752, %v770
        %773 = vrot.lane.b32.xlu0 %v663, 96
        %v774 = vpop.permute.xlu0 %773
        %775 = vrot.lane.b32.xlu0 %v664, 96
        %v776 = vpop.permute.xlu0 %775
        %777 = vrot.lane.b32.xlu0 %v665, 96
        %v778 = vpop.permute.xlu0 %777
        %v779 = vsel %vm465, %v774, %v776
        %v780 = vsel %vm465, %v776, %v778
        %v783 = vsel %vm287, %v779, 0.0
        %v784 = vsel %vm288, %v780, 0.0
        %785 = vset.pattern.permute.xlu0 6
        %786 = vperm.xlu0 %785, %v653
        %v787 = vpop.permute.xlu0 %786
        %v789 = vmul.f32 %v783, %v787
        %v790 = vmul.f32 %v784, %v787
        %v791 = vadd.f32 %v771, %v789
        %v792 = vadd.f32 %v772, %v790
        %793 = vset.pattern.permute.xlu0 7
        %794 = vperm.xlu0 %793, %v653
        %v795 = vpop.permute.xlu0 %794
        %v797 = vmul.f32 %v663, %v795
        %v798 = vmul.f32 %v664, %v795
        %v799 = vmul.f32 %v665, %v795
        %803 = vrot.lane.b32.xlu0 %v797, 95
        %v804 = vpop.permute.xlu0 %803
        %805 = vrot.lane.b32.xlu0 %v798, 95
        %v806 = vpop.permute.xlu0 %805
        %807 = vrot.lane.b32.xlu0 %v799, 95
        %v808 = vpop.permute.xlu0 %807
        %v809 = vsel %vm506, %v804, %v806
        %v810 = vsel %vm506, %v806, %v808
        %v813 = vadd.f32 %v791, %v809
        %v814 = vadd.f32 %v792, %v810
        %815 = vrot.lane.b32.xlu0 %v663, 94
        %v816 = vpop.permute.xlu0 %815
        %817 = vrot.lane.b32.xlu0 %v664, 94
        %v818 = vpop.permute.xlu0 %817
        %819 = vrot.lane.b32.xlu0 %v665, 94
        %v820 = vpop.permute.xlu0 %819
        %v821 = vsel %vm524, %v816, %v818
        %v822 = vsel %vm524, %v818, %v820
        %v825 = vsel %vm339, %v821, 0.0
        %v826 = vsel %vm340, %v822, 0.0
        %827 = vset.pattern.permute.xlu0 8
        %828 = vperm.xlu0 %827, %v653
        %v829 = vpop.permute.xlu0 %828
        %v831 = vmul.f32 %v825, %v829
        %v832 = vmul.f32 %v826, %v829
        %v833 = vadd.f32 %v813, %v831
        %v834 = vadd.f32 %v814, %v832
        %v835 = vld [vmem:[%s4] sm:$0xf]
        %vm836 = vcmask 64512
        %v838 = vsel %vm836, %v835, 0
        %840 = vmatprep.subr.mxu0 %v834
        %841 = vmatpush1.msra.mxu0 %v833
        %842 = vmatprep.subr.mxu0 0.0
        %843 = vmatpush1.msra.mxu0 0.0
        %844 = vmatprep.subr.mxu0 0.0
        %845 = vmatpush1.msra.mxu0 0.0
        %846 = vmatprep.subr.mxu0 0.0
        %847 = vmatpush1.msra.mxu0 0.0
        %848 = vmatprep.subr.mxu0 0.0
        %849 = vmatpush1.msra.mxu0 0.0
        %850 = vmatprep.subr.mxu0 0.0
        %851 = vmatpush1.msra.mxu0 0.0
        %852 = vmatprep.subr.mxu0 0.0
        %853 = vmatpush1.msra.mxu0 0.0
        %854 = vmatprep.subr.mxu0 0.0
        %855 = vmatpush1.msra.mxu0 0.0
        %856 = vmatprep.subr.mxu0 0.0
        %857 = vmatpush1.msra.mxu0 0.0
        %858 = vmatprep.subr.mxu0 0.0
        %859 = vmatpush1.msra.mxu0 0.0
        %860 = vmatprep.subr.mxu0 0.0
        %861 = vmatpush1.msra.mxu0 0.0
        %862 = vmatprep.subr.mxu0 0.0
        %863 = vmatpush1.msra.mxu0 0.0
        %864 = vmatprep.subr.mxu0 0.0
        %865 = vmatpush1.msra.mxu0 0.0
        %866 = vmatprep.subr.mxu0 0.0
        %867 = vmatpush1.msra.mxu0 0.0
        %868 = vmatprep.subr.mxu0 0.0
        %869 = vmatpush1.msra.mxu0 0.0
        %870 = vmatprep.subr.mxu0 0.0
        %871 = vmatpush1.msra.mxu0 0.0
        %872 = vmatprep.subr.mxu0 0.0
        %873 = vmatpush1.msra.mxu0 0.0
        %874 = vmatprep.subr.mxu0 0.0
        %875 = vmatpush1.msra.mxu0 0.0
        %876 = vmatprep.subr.mxu0 0.0
        %877 = vmatpush1.msra.mxu0 0.0
        %878 = vmatprep.subr.mxu0 0.0
        %879 = vmatpush1.msra.mxu0 0.0
        %880 = vmatprep.subr.mxu0 0.0
        %881 = vmatpush1.msra.mxu0 0.0
        %882 = vmatprep.subr.mxu0 0.0
        %883 = vmatpush1.msra.mxu0 0.0
        %884 = vmatprep.subr.mxu0 0.0
        %885 = vmatpush1.msra.mxu0 0.0
        %886 = vmatprep.subr.mxu0 0.0
        %887 = vmatpush1.msra.mxu0 0.0
        %888 = vmatprep.subr.mxu0 0.0
        %889 = vmatpush1.msra.mxu0 0.0
        %890 = vmatprep.subr.mxu0 0.0
        %891 = vmatpush1.msra.mxu0 0.0
        %892 = vmatprep.subr.mxu0 0.0
        %893 = vmatpush1.msra.mxu0 0.0
        %894 = vmatprep.subr.mxu0 0.0
        %895 = vmatpush1.msra.mxu0 0.0
        %896 = vmatprep.subr.mxu0 0.0
        %897 = vmatpush1.msra.mxu0 0.0
        %898 = vmatprep.subr.mxu0 0.0
        %899 = vmatpush1.msra.mxu0 0.0
        %900 = vmatprep.subr.mxu0 0.0
        %901 = vmatpush1.msra.mxu0 0.0
        %902 = vmatprep.subr.mxu0 0.0
        %903 = vmatpush1.msra.mxu0 0.0
        %904 = vmatprep.mubr.f32.mxu0 0.0
        %905 = vmatmul.mubr.f32.gmra.mrb[0].mxu0 %v838
        %v906 = vpop.f32.mrb[0].mxu0
        %v907 = vadd.f32 0.0, %v906
        %v908 = vpop.f32.mrb[0].mxu0
        %v909 = vadd.f32 0.0, %v908
        %910 = vdwg.mxu0
        %v911 = vld [vmem:[%s214] sm:$0xff]
        %v912 = vld [vmem:[%s214 + $0x8] sm:$0xf]
        %v915 = vcombine.low %v907, %v909
        %916 = vrot.lane.b32.xlu0 %v915, 17
        %v917 = vpop.permute.xlu0 %916
        %v918 = vrot.slane %v917, 4
        %v919 = vsel %vm640, %v918, %v917
        %v922 = vadd.f32 %v911, %v919
        %v923 = vadd.f32 %v912, %v918
        %vm924 = vcmp.gt.f32.partialorder %v922, 0.0
        %vm925 = vcmp.gt.f32.partialorder %v923, 0.0
        %v926 = vmul.f32 %v922, 0.01
        %v927 = vmul.f32 %v923, 0.01
        %v928 = vsel %vm924, %v922, %v926
        %v929 = vsel %vm925, %v923, %v927
        %932 = vrot.lane.b32.xlu0 %v928, 111
        %v933 = vpop.permute.xlu0 %932
        %934 = vrot.lane.b32.xlu0 %v929, 111
        %v935 = vpop.permute.xlu0 %934
        %v936 = vrot.slane %v933, 4
        %v937 = vrot.slane %v935, 4
        %v938 = vsel %vm546, %v936, %v937
        %v939 = vsel %vm419, %v933, %v938
        %941 = vst [vmem:[%s240] sm:$0xff] %v939
        %s942 = sand.u32 %s140, 1
        %s943 = scalar_lea.sflag [#allocation5], %s942
        %s944 = sand.u32 %s140, 1
        %s945 = smul.addr %s944, 8
        %s946 = scalar_lea.vmem [#allocation6], %s945
        // Predicated region
        $region45: #{tpu_custom_call.1} parent=39 // pred_check
          %p947 = pneg %p150
        $region46: #{tpu_custom_call.1} parent=39 // pred_check_branch
          %949 = sbr.rel (%p947) target = $region48
        $region47: #{tpu_custom_call.1} parent=39 // pred_region
          %s951 = ssub.s32 128, 128
          %952 = vsyncadd %s943, %s951
          %s953 = smul.addr %s22, 2
          %s954 = smul.addr %s953, 64
          %s955 = scalar_lea.hbm %s5, %s954
          %s957 = sshll.u32 %s946, 4
          %s958 = int_to_ptr.vmem [resolvable:$true] %s957
          %960 = dma.vmem_to_hbm [thread:$0]  %s958, 128, %s955, %s943
        $region48: #{tpu_custom_call.1} parent=39 // pred_fallthru
          _
      $region40: #{tpu_custom_call.1} parent=5 // pred_fallthru
        _
      %p961 = scmp.le.s32.totalorder 2, %s17
      // Predicated region
      $region49: #{tpu_custom_call.1} parent=5 // pred_check
        %p962 = pneg %p961
      $region50: #{tpu_custom_call.1} parent=5 // pred_check_branch
        %964 = sbr.rel (%p962) target = $region52
      $region51: #{tpu_custom_call.1} parent=5 // pred_region
        %s965 = ssub.s32 %s17, 2
        // Predicated region
        $region53: #{tpu_custom_call.1} parent=51 // pred_check
          %p966 = pneg %p156
        $region54: #{tpu_custom_call.1} parent=51 // pred_check_branch
          %968 = sbr.rel (%p966) target = $region56
        $region55: #{tpu_custom_call.1} parent=51 // pred_region
          %s969 = sand.u32 %s141, 1
          %s970 = scalar_lea.sflag [#allocation5], %s969
          %s971 = sand.u32 %s141, 1
          %s972 = smul.addr %s971, 8
          %s973 = scalar_lea.vmem [#allocation6], %s972
          %974 = dma.done %s970, 128
        $region56: #{tpu_custom_call.1} parent=51 // pred_fallthru
          _
      $region52: #{tpu_custom_call.1} parent=5 // pred_fallthru
        _
    $region6: #{tpu_custom_call.1} parent=1 // loop_footer
      %s21 = sadd.s32 1, %s17
    $region7: #{tpu_custom_call.1} parent=1 // loop_footer_branch
      %16 = sbr.rel target = $region3
    $region8: #{tpu_custom_call.1} parent=1 // loop_exit
      _
    %975 = vsyncpa [#allocation4], 1
    %s976 = scalar_lea.sflag [#allocation4], 1
    %977 = vsyncpa %s976, 1
    %978 = vsyncpa [#allocation5], 1
    %s979 = scalar_lea.sflag [#allocation5], 1
    %980 = vsyncpa %s979, 1

</llo_original>
